<compile_context>
chip_gen: v5e
topology: v5e:2x2
jax: 0.10.0
libtpu: 0.0.40
codegen_flags: <defaults>
</compile_context>

<pallas_src>
import jax
import jax.numpy as jnp
from jax.experimental import pallas as pl
from jax.experimental.pallas import tpu as pltpu


def _dqn_kernel(x_ref, w1_ref, b1_ref, w2_ref, b2_ref, w3_ref, b3_ref, out_ref):
    # In-kernel f32 -> bf16 cast of the activations (saves a separate HBM pass).
    x = x_ref[...].astype(jnp.bfloat16)
    # fc1 + ReLU  (bf16 operands, f32 MXU accumulation; elementwise stays f32)
    h1 = jnp.dot(x, w1_ref[...], preferred_element_type=jnp.float32)
    h1 = jnp.maximum(h1 + b1_ref[...], 0.0)
    # fc2 + ReLU
    h2 = jnp.dot(h1.astype(jnp.bfloat16), w2_ref[...],
                 preferred_element_type=jnp.float32)
    h2 = jnp.maximum(h2 + b2_ref[...], 0.0)
    # fc3 (no activation)
    out = jnp.dot(h2.astype(jnp.bfloat16), w3_ref[...],
                  preferred_element_type=jnp.float32)
    out_ref[...] = (out + b3_ref[...]).astype(out_ref.dtype)


def _round_up(n, m):
    return ((n + m - 1) // m) * m


def make_dqn_forward(params, batch_tile=512, out_dtype=jnp.float32):
    """One-time parameter prep + jitted forward(x_nchw) -> [B, d_out].

    batch_tile: max batch rows per grid step (default 512; sweep 256-1024).
    out_dtype:  set to jnp.bfloat16 to halve output writeback if the consumer
                (e.g. TD-target math) tolerates it; default f32.
    """
    w1, b1, w2, b2, w3, b3 = params

    # --- one-time prep, outside the per-call path ---
    w1t = jnp.asarray(w1.T, jnp.bfloat16)           # (in, out)
    w2t = jnp.asarray(w2.T, jnp.bfloat16)
    w3t = jnp.asarray(w3.T, jnp.bfloat16)
    b1r = jnp.asarray(b1, jnp.float32).reshape(1, -1)
    b2r = jnp.asarray(b2, jnp.float32).reshape(1, -1)
    b3r = jnp.asarray(b3, jnp.float32).reshape(1, -1)

    d_in, d_h1 = w1t.shape
    d_h2 = w2t.shape[1]
    d_out = w3t.shape[1]

    batch_tile = max(16, _round_up(int(batch_tile), 16))

    def _resident(shape):
        # Block index never changes -> single buffer, DMA'd once, reused by
        # every batch tile.
        if hasattr(pl, "Buffered"):
            return pl.BlockSpec(shape, lambda i: (0, 0), pipeline_mode=pl.Buffered(1))
        return pl.BlockSpec(shape, lambda i: (0, 0))

    @jax.jit
    def forward(x_nchw):
        B = x_nchw.shape[0]
        # nn.Flatten(): C-order flatten of dims 1..3 (torch NCHW semantics).
        # Free metadata reshape; dtype stays f32 (cast happens in-kernel).
        x = x_nchw.reshape(B, -1)

        # Tile: 16-row aligned (bf16 sublane packing), capped at batch_tile,
        # and sized so mid/large batches produce >= 2 grid steps (engages both
        # v7x TensorCores; 256+ rows also fills the v6e/v7x MXU M dimension).
        half = _round_up(max(-(-B // 2), 16), 16)
        tb = min(batch_tile, half)
        grid = pl.cdiv(B, tb)   # no jnp.pad: partial last block is masked

        out = pl.pallas_call(
            _dqn_kernel,
            out_shape=jax.ShapeDtypeStruct((B, d_out), out_dtype),
            grid=(grid,),
            in_specs=[
                pl.BlockSpec((tb, d_in), lambda i: (i, 0)),  # x: f32, batch-tiled
                _resident((d_in, d_h1)),                     # w1 (in,out) bf16
                _resident((1, d_h1)),                        # b1 f32
                _resident((d_h1, d_h2)),                     # w2
                _resident((1, d_h2)),                        # b2
                _resident((d_h2, d_out)),                    # w3
                _resident((1, d_out)),                       # b3
            ],
            out_specs=pl.BlockSpec((tb, d_out), lambda i: (i, 0)),
            compiler_params=pltpu.CompilerParams(
                dimension_semantics=("parallel",),  # shard batch tiles over v7x's 2 TCs
            ),
        )(x, w1t, b1r, w2t, b2r, w3t, b3r)
        return out

    return forward


def init_params(key, input_dim, output_dim, hidden=128):
    """Deterministic synthetic parameters (PyTorch Linear shapes: W=(out,in), b=(out,))."""
    ks = jax.random.split(key, 6)

    def lin(kw, kb, d_in, d_out):
        scale = 1.0 / jnp.sqrt(jnp.float32(d_in))
        w = jax.random.uniform(kw, (d_out, d_in), jnp.float32, -scale, scale)
        b = jax.random.uniform(kb, (d_out,), jnp.float32, -scale, scale)
        return w, b

    w1, b1 = lin(ks[0], ks[1], input_dim, hidden)
    w2, b2 = lin(ks[2], ks[3], hidden, hidden)
    w3, b3 = lin(ks[4], ks[5], hidden, output_dim)
    return (w1, b1, w2, b2, w3, b3)


def reference_forward_f32(x_nchw, params):
    """Plain-JAX f32 reference replicating torch semantics exactly."""
    w1, b1, w2, b2, w3, b3 = params
    x = x_nchw.reshape(x_nchw.shape[0], -1)
    h1 = jnp.maximum(x @ w1.T + b1, 0.0)
    h2 = jnp.maximum(h1 @ w2.T + b2, 0.0)
    return h2 @ w3.T + b3


def reference_forward_bf16(x_nchw, params):
    """Reference with the same bf16-operand / f32-accumulate numerics as the kernel."""
    w1, b1, w2, b2, w3, b3 = params
    x = x_nchw.reshape(x_nchw.shape[0], -1).astype(jnp.bfloat16)
    w1t = w1.T.astype(jnp.bfloat16)
    w2t = w2.T.astype(jnp.bfloat16)
    w3t = w3.T.astype(jnp.bfloat16)
    h1 = jnp.maximum(jnp.dot(x, w1t, preferred_element_type=jnp.float32) + b1, 0.0)
    h2 = jnp.maximum(
        jnp.dot(h1.astype(jnp.bfloat16), w2t, preferred_element_type=jnp.float32) + b2, 0.0)
    return jnp.dot(h2.astype(jnp.bfloat16), w3t, preferred_element_type=jnp.float32) + b3


if __name__ == "__main__":
    key = jax.random.PRNGKey(0)
    k_x, k_p, k_x2 = jax.random.split(key, 3)

    # Minesweeper-style board: batch=2, 4 channels, 16x16 grid -> input_dim=1024,
    # output_dim = number of cells = 256.
    B, C, H, W = 2, 4, 16, 16
    input_dim = C * H * W
    output_dim = H * W

    x = jax.random.normal(k_x, (B, C, H, W), dtype=jnp.float32)
    params = init_params(k_p, input_dim, output_dim)

    forward = make_dqn_forward(params)
    out = jax.block_until_ready(forward(x))

    assert out.shape == (B, output_dim), out.shape
    assert out.dtype == jnp.float32, out.dtype

    # Tight check vs a reference with matching bf16-operand / f32-accumulate numerics.
    ref_bf16 = reference_forward_bf16(x, params)
    assert jnp.allclose(out, ref_bf16, atol=1e-3, rtol=1e-3), "mismatch vs bf16 reference"
    # Loose check vs the exact f32 torch-semantics reference (bf16 weight rounding).
    ref_f32 = reference_forward_f32(x, params)
    assert jnp.allclose(out, ref_f32, atol=5e-2, rtol=5e-2), "mismatch vs f32 reference"

    # Ragged, multi-tile batch: exercises the pad-free masked last block and the
    # >=2-step grid path (both v7x TensorCores).
    B2 = 40
    x2 = jax.random.normal(k_x2, (B2, C, H, W), dtype=jnp.float32)
    out2 = jax.block_until_ready(forward(x2))
    assert out2.shape == (B2, output_dim), out2.shape
    assert jnp.allclose(out2, reference_forward_bf16(x2, params), atol=1e-3, rtol=1e-3), \
        "mismatch vs bf16 reference (ragged batch)"

    print("KERNEL_OK")
</pallas_src>

<mosaic_0001>
module attributes {stable_mosaic.version = 11 : i64} {
  func.func @_dqn_kernel(%arg0: i32, %arg1: memref<16x1024xf32, #tpu.memory_space<vmem>>, %arg2: memref<1024x128xbf16, #tpu.memory_space<vmem>>, %arg3: memref<1x128xf32, #tpu.memory_space<vmem>>, %arg4: memref<128x128xbf16, #tpu.memory_space<vmem>>, %arg5: memref<1x128xf32, #tpu.memory_space<vmem>>, %arg6: memref<128x256xbf16, #tpu.memory_space<vmem>>, %arg7: memref<1x256xf32, #tpu.memory_space<vmem>>, %arg8: memref<16x256xf32, #tpu.memory_space<vmem>>) attributes {dimension_semantics = [#tpu.dimension_semantics<parallel>], iteration_bounds = array<i64: 1>, scalar_prefetch = 0 : i64, scratch_operands = 0 : i64, tpu.core_type = #tpu.core_type<tc>, window_params = [{transform_indices = @transform_0, window_bounds = array<i64: 16, 1024>}, {pipeline_mode = #tpu.pipeline_mode<synchronous>, transform_indices = @transform_1, window_bounds = array<i64: 1024, 128>}, {pipeline_mode = #tpu.pipeline_mode<synchronous>, transform_indices = @transform_2, window_bounds = array<i64: 1, 128>}, {pipeline_mode = #tpu.pipeline_mode<synchronous>, transform_indices = @transform_3, window_bounds = array<i64: 128, 128>}, {pipeline_mode = #tpu.pipeline_mode<synchronous>, transform_indices = @transform_4, window_bounds = array<i64: 1, 128>}, {pipeline_mode = #tpu.pipeline_mode<synchronous>, transform_indices = @transform_5, window_bounds = array<i64: 128, 256>}, {pipeline_mode = #tpu.pipeline_mode<synchronous>, transform_indices = @transform_6, window_bounds = array<i64: 1, 256>}, {transform_indices = @transform_7, window_bounds = array<i64: 16, 256>}]} {
    %c0 = arith.constant 0 : index
    %c0_0 = arith.constant 0 : index
    %0 = vector.load %arg1[%c0, %c0_0] : memref<16x1024xf32, #tpu.memory_space<vmem>>, vector<16x1024xf32>
    %1 = arith.truncf %0 : vector<16x1024xf32> to vector<16x1024xbf16>
    %c0_1 = arith.constant 0 : index
    %c0_2 = arith.constant 0 : index
    %2 = vector.load %arg2[%c0_1, %c0_2] : memref<1024x128xbf16, #tpu.memory_space<vmem>>, vector<1024x128xbf16>
    %cst = arith.constant dense<0.000000e+00> : vector<16x128xf32>
    %3 = tpu.matmul %1, %2, %cst {dimension_numbers = #tpu.dot_dimension_numbers<[1], [0], [0], [1], [0, 0, 1, 1], [], []>} : vector<16x1024xbf16>, vector<1024x128xbf16>, vector<16x128xf32> -> vector<16x128xf32>
    %c0_3 = arith.constant 0 : index
    %c0_4 = arith.constant 0 : index
    %4 = vector.load %arg3[%c0_3, %c0_4] : memref<1x128xf32, #tpu.memory_space<vmem>>, vector<1x128xf32>
    %5 = vector.broadcast %4 : vector<1x128xf32> to vector<16x128xf32>
    %6 = arith.addf %3, %5 : vector<16x128xf32>
    %cst_5 = arith.constant 0.000000e+00 : f32
    %7 = vector.broadcast %cst_5 : f32 to vector<16x128xf32>
    %8 = arith.maximumf %6, %7 : vector<16x128xf32>
    %9 = arith.truncf %8 : vector<16x128xf32> to vector<16x128xbf16>
    %c0_6 = arith.constant 0 : index
    %c0_7 = arith.constant 0 : index
    %10 = vector.load %arg4[%c0_6, %c0_7] : memref<128x128xbf16, #tpu.memory_space<vmem>>, vector<128x128xbf16>
    %cst_8 = arith.constant dense<0.000000e+00> : vector<16x128xf32>
    %11 = tpu.matmul %9, %10, %cst_8 {dimension_numbers = #tpu.dot_dimension_numbers<[1], [0], [0], [1], [0, 0, 1, 1], [], []>} : vector<16x128xbf16>, vector<128x128xbf16>, vector<16x128xf32> -> vector<16x128xf32>
    %c0_9 = arith.constant 0 : index
    %c0_10 = arith.constant 0 : index
    %12 = vector.load %arg5[%c0_9, %c0_10] : memref<1x128xf32, #tpu.memory_space<vmem>>, vector<1x128xf32>
    %13 = vector.broadcast %12 : vector<1x128xf32> to vector<16x128xf32>
    %14 = arith.addf %11, %13 : vector<16x128xf32>
    %cst_11 = arith.constant 0.000000e+00 : f32
    %15 = vector.broadcast %cst_11 : f32 to vector<16x128xf32>
    %16 = arith.maximumf %14, %15 : vector<16x128xf32>
    %17 = arith.truncf %16 : vector<16x128xf32> to vector<16x128xbf16>
    %c0_12 = arith.constant 0 : index
    %c0_13 = arith.constant 0 : index
    %18 = vector.load %arg6[%c0_12, %c0_13] : memref<128x256xbf16, #tpu.memory_space<vmem>>, vector<128x256xbf16>
    %cst_14 = arith.constant dense<0.000000e+00> : vector<16x256xf32>
    %19 = tpu.matmul %17, %18, %cst_14 {dimension_numbers = #tpu.dot_dimension_numbers<[1], [0], [0], [1], [0, 0, 1, 1], [], []>} : vector<16x128xbf16>, vector<128x256xbf16>, vector<16x256xf32> -> vector<16x256xf32>
    %c0_15 = arith.constant 0 : index
    %c0_16 = arith.constant 0 : index
    %20 = vector.load %arg7[%c0_15, %c0_16] : memref<1x256xf32, #tpu.memory_space<vmem>>, vector<1x256xf32>
    %21 = vector.broadcast %20 : vector<1x256xf32> to vector<16x256xf32>
    %22 = arith.addf %19, %21 : vector<16x256xf32>
    %c0_17 = arith.constant 0 : index
    %c0_18 = arith.constant 0 : index
    %23 = vector.load %arg8[%c0_17, %c0_18] : memref<16x256xf32, #tpu.memory_space<vmem>>, vector<16x256xf32>
    tpu.vector_store %arg8[%c0_17, %c0_18], %22 {strides = array<i32>} : memref<16x256xf32, #tpu.memory_space<vmem>>, vector<16x256xf32>,
    return
  }
  func.func @transform_0(%arg0: i32) -> (i32, i32) {
    %c0_i32 = arith.constant 0 : i32
    %c0_i32_0 = arith.constant 0 : i32
    return %arg0, %c0_i32 : i32, i32
  }
  func.func @transform_1(%arg0: i32) -> (i32, i32) {
    %c0_i32 = arith.constant 0 : i32
    %c0_i32_0 = arith.constant 0 : i32
    %c0_i32_1 = arith.constant 0 : i32
    return %c0_i32, %c0_i32_0 : i32, i32
  }
  func.func @transform_2(%arg0: i32) -> (i32, i32) {
    %c0_i32 = arith.constant 0 : i32
    %c0_i32_0 = arith.constant 0 : i32
    %c0_i32_1 = arith.constant 0 : i32
    return %c0_i32, %c0_i32_0 : i32, i32
  }
  func.func @transform_3(%arg0: i32) -> (i32, i32) {
    %c0_i32 = arith.constant 0 : i32
    %c0_i32_0 = arith.constant 0 : i32
    %c0_i32_1 = arith.constant 0 : i32
    return %c0_i32, %c0_i32_0 : i32, i32
  }
  func.func @transform_4(%arg0: i32) -> (i32, i32) {
    %c0_i32 = arith.constant 0 : i32
    %c0_i32_0 = arith.constant 0 : i32
    %c0_i32_1 = arith.constant 0 : i32
    return %c0_i32, %c0_i32_0 : i32, i32
  }
  func.func @transform_5(%arg0: i32) -> (i32, i32) {
    %c0_i32 = arith.constant 0 : i32
    %c0_i32_0 = arith.constant 0 : i32
    %c0_i32_1 = arith.constant 0 : i32
    return %c0_i32, %c0_i32_0 : i32, i32
  }
  func.func @transform_6(%arg0: i32) -> (i32, i32) {
    %c0_i32 = arith.constant 0 : i32
    %c0_i32_0 = arith.constant 0 : i32
    %c0_i32_1 = arith.constant 0 : i32
    return %c0_i32, %c0_i32_0 : i32, i32
  }
  func.func @transform_7(%arg0: i32) -> (i32, i32) {
    %c0_i32 = arith.constant 0 : i32
    %c0_i32_0 = arith.constant 0 : i32
    return %arg0, %c0_i32 : i32, i32
  }
}

</mosaic_0001>

<llo_original>
// kernel: forward.1
$region0: #{forward.1}
  #allocation0 [shape = 'u32[]', space=smem, size = 0x4, offset = 0x4, fixed_abs, tag = 'smem constant byte address 0x4 - core index']
  #allocation1 [shape = 'u32[72,128]{1,0:T(1,128)}', space=vmem, size = 0x9000, scoped, tag = 'internal scratch']
  %s0 = inlined_call_operand.vmem [shape: f32[2,1024], index: 0, kind: input, shape index: {}]
  %s1 = inlined_call_operand.hbm [shape: bf16[1024,128], index: 1, kind: input, shape index: {}]
  %s2 = inlined_call_operand.vmem [shape: f32[1,128], index: 2, kind: input, shape index: {}]
  %s3 = inlined_call_operand.hbm [shape: bf16[128,128], index: 3, kind: input, shape index: {}]
  %s4 = inlined_call_operand.vmem [shape: f32[1,128], index: 4, kind: input, shape index: {}]
  %s5 = inlined_call_operand.vmem [shape: bf16[128,256], index: 5, kind: input, shape index: {}]
  %s6 = inlined_call_operand.vmem [shape: f32[1,256], index: 6, kind: input, shape index: {}]
  %s7 = inlined_call_operand.hbm [shape: f32[2,256], index: 7, kind: output, shape index: {}]
  %s8 = sld [smem:[#allocation0]]
  $region46: #{forward.1} parent=0
    _
  %s10 = ssub.s32 1, %s8
  %s11 = scalar_select 0, %s10, %s8
  $region1: #{forward.1} parent=0
    #allocation2 [shape = 'u8[262144]{0}', space=vmem, size = 0x40000, scoped, tag = 'input window, operand 1, single buffered']
    #allocation3 [shape = 's32[1]{0}', space=sflag, size = 0x4, scoped, tag = 'scoped memory for forward.1']
    #allocation4 [shape = 's32[1]{0}', space=sflag, size = 0x4, scoped, tag = 'scoped memory for forward.1']
    #allocation5 [shape = 'u8[32768]{0}', space=vmem, size = 0x8000, scoped, tag = 'input window, operand 3, single buffered']
    #allocation6 [shape = 's32[1]{0}', space=sflag, size = 0x4, scoped, tag = 'scoped memory for forward.1']
    #allocation7 [shape = 'u8[16384]{0}', space=vmem, size = 0x4000, scoped, tag = 'output window, operand 0, single buffered']
    %12 = vsyncpa [#allocation3], 0
    %13 = vsyncpa [#allocation6], 0
    %14 = vsyncpa [#allocation4], 0
    // Predicated region
    $region2: #{forward.1} parent=1 // pred_check
      _
    $region3: #{forward.1} parent=1 // pred_check_branch
      %16 = sbr.rel (0) target = $region5
    $region4: #{forward.1} parent=1 // pred_region
      _
    $region5: #{forward.1} parent=1 // pred_fallthru
      _
    // Predicated region
    $region6: #{forward.1} parent=1 // pred_check
      _
    $region7: #{forward.1} parent=1 // pred_check_branch
      %18 = sbr.rel (0) target = $region9
    $region8: #{forward.1} parent=1 // pred_region
      %20 = vsyncadd [#allocation3], 0
      %s21 = sshll.u32 %s1, 4
      %s22 = int_to_ptr.hbm [resolvable:$true] %s21
      %s23 = sshll.u32 [#allocation2], 4
      %s24 = int_to_ptr.vmem [resolvable:$true] %s23
      %29 = dma.hbm_to_vmem [thread:$0]  %s22, 8192, %s24, [#allocation3], 64, 64, 4
    $region9: #{forward.1} parent=1 // pred_fallthru
      _
    // Predicated region
    $region10: #{forward.1} parent=1 // pred_check
      _
    $region11: #{forward.1} parent=1 // pred_check_branch
      %31 = sbr.rel (0) target = $region13
    $region12: #{forward.1} parent=1 // pred_region
      _
    $region13: #{forward.1} parent=1 // pred_fallthru
      _
    // Predicated region
    $region14: #{forward.1} parent=1 // pred_check
      _
    $region15: #{forward.1} parent=1 // pred_check_branch
      %33 = sbr.rel (0) target = $region17
    $region16: #{forward.1} parent=1 // pred_region
      %35 = vsyncadd [#allocation6], 0
      %s36 = sshll.u32 %s3, 4
      %s37 = int_to_ptr.hbm [resolvable:$true] %s36
      %s38 = sshll.u32 [#allocation5], 4
      %s39 = int_to_ptr.vmem [resolvable:$true] %s38
      %44 = dma.hbm_to_vmem [thread:$0]  %s37, 1024, %s39, [#allocation6], 64, 64, 4
    $region17: #{forward.1} parent=1 // pred_fallthru
      _
    // Predicated region
    $region18: #{forward.1} parent=1 // pred_check
      _
    $region19: #{forward.1} parent=1 // pred_check_branch
      %46 = sbr.rel (0) target = $region21
    $region20: #{forward.1} parent=1 // pred_region
      _
    $region21: #{forward.1} parent=1 // pred_fallthru
      _
    // Predicated region
    $region22: #{forward.1} parent=1 // pred_check
      _
    $region23: #{forward.1} parent=1 // pred_check_branch
      %48 = sbr.rel (0) target = $region25
    $region24: #{forward.1} parent=1 // pred_region
      _
    $region25: #{forward.1} parent=1 // pred_fallthru
      _
    // Predicated region
    $region26: #{forward.1} parent=1 // pred_check
      _
    $region27: #{forward.1} parent=1 // pred_check_branch
      %50 = sbr.rel (0) target = $region29
    $region28: #{forward.1} parent=1 // pred_region
      _
    $region29: #{forward.1} parent=1 // pred_fallthru
      _
    // Predicated region
    $region30: #{forward.1} parent=1 // pred_check
      _
    $region31: #{forward.1} parent=1 // pred_check_branch
      %52 = sbr.rel (0) target = $region33
    $region32: #{forward.1} parent=1 // pred_region
      %54 = dma.done [#allocation3], 8192
    $region33: #{forward.1} parent=1 // pred_fallthru
      _
    // Predicated region
    $region34: #{forward.1} parent=1 // pred_check
      _
    $region35: #{forward.1} parent=1 // pred_check_branch
      %56 = sbr.rel (0) target = $region37
    $region36: #{forward.1} parent=1 // pred_region
      %58 = dma.done [#allocation6], 1024
    $region37: #{forward.1} parent=1 // pred_fallthru
      _
    %v59 = vld [vmem:[%s0] sm:$0xff]
    %v60 = vld [vmem:[%s0 + $0x8] sm:$0xff]
    %v61 = vld [vmem:[%s0 + $0x10] sm:$0xff]
    %v62 = vld [vmem:[%s0 + $0x18] sm:$0xff]
    %v63 = vld [vmem:[%s0 + $0x20] sm:$0xff]
    %v64 = vld [vmem:[%s0 + $0x28] sm:$0xff]
    %v65 = vld [vmem:[%s0 + $0x30] sm:$0xff]
    %v66 = vld [vmem:[%s0 + $0x38] sm:$0xff]
    %v67 = vld [vmem:[%s0 + $0x40] sm:$0xff]
    %v68 = vld [vmem:[%s0 + $0x48] sm:$0xff]
    %v69 = vld [vmem:[%s0 + $0x50] sm:$0xff]
    %v70 = vld [vmem:[%s0 + $0x58] sm:$0xff]
    %v71 = vld [vmem:[%s0 + $0x60] sm:$0xff]
    %v72 = vld [vmem:[%s0 + $0x68] sm:$0xff]
    %v73 = vld [vmem:[%s0 + $0x70] sm:$0xff]
    %v74 = vld [vmem:[%s0 + $0x78] sm:$0xff]
    %91 = vst [vmem:[#allocation1] ss:$4 sm:$0xff] %v59
    %s92 = scalar_lea.vmem [#allocation1], 1
    %93 = vst [vmem:[%s92] ss:$4 sm:$0xff] %v61
    %s94 = scalar_lea.vmem [#allocation1], 2
    %95 = vst [vmem:[%s94] ss:$4 sm:$0xff] %v63
    %s96 = scalar_lea.vmem [#allocation1], 3
    %97 = vst [vmem:[%s96] ss:$4 sm:$0xff] %v65
    %s98 = scalar_lea.vmem [#allocation1], 32
    %99 = vst [vmem:[%s98] ss:$4 sm:$0xff] %v60
    %s100 = scalar_lea.vmem [#allocation1], 33
    %101 = vst [vmem:[%s100] ss:$4 sm:$0xff] %v62
    %s102 = scalar_lea.vmem [#allocation1], 34
    %103 = vst [vmem:[%s102] ss:$4 sm:$0xff] %v64
    %s104 = scalar_lea.vmem [#allocation1], 35
    %105 = vst [vmem:[%s104] ss:$4 sm:$0xff] %v66
    %v106 = vld.sshfl [vmem:[#allocation1] sm:$0xff pattern:$0x73625140]
    %v107 = vld.sshfl [vmem:[#allocation1 + $0x8] sm:$0xff pattern:$0x73625140]
    %v108 = vld.sshfl [vmem:[#allocation1 + $0x10] sm:$0xff pattern:$0x73625140]
    %v109 = vld.sshfl [vmem:[#allocation1 + $0x18] sm:$0xff pattern:$0x73625140]
    %v110 = vld.sshfl [vmem:[#allocation1 + $0x20] sm:$0xff pattern:$0x73625140]
    %v111 = vld.sshfl [vmem:[#allocation1 + $0x28] sm:$0xff pattern:$0x73625140]
    %v112 = vld.sshfl [vmem:[#allocation1 + $0x30] sm:$0xff pattern:$0x73625140]
    %v113 = vld.sshfl [vmem:[#allocation1 + $0x38] sm:$0xff pattern:$0x73625140]
    %114 = vst [vmem:[#allocation1] ss:$4 sm:$0xff] %v67
    %115 = vst [vmem:[%s92] ss:$4 sm:$0xff] %v69
    %116 = vst [vmem:[%s94] ss:$4 sm:$0xff] %v71
    %117 = vst [vmem:[%s96] ss:$4 sm:$0xff] %v73
    %118 = vst [vmem:[%s98] ss:$4 sm:$0xff] %v68
    %119 = vst [vmem:[%s100] ss:$4 sm:$0xff] %v70
    %120 = vst [vmem:[%s102] ss:$4 sm:$0xff] %v72
    %121 = vst [vmem:[%s104] ss:$4 sm:$0xff] %v74
    %v122 = vld.sshfl [vmem:[#allocation1] sm:$0xff pattern:$0x73625140]
    %v123 = vld.sshfl [vmem:[#allocation1 + $0x8] sm:$0xff pattern:$0x73625140]
    %v124 = vld.sshfl [vmem:[#allocation1 + $0x10] sm:$0xff pattern:$0x73625140]
    %v125 = vld.sshfl [vmem:[#allocation1 + $0x18] sm:$0xff pattern:$0x73625140]
    %v126 = vld.sshfl [vmem:[#allocation1 + $0x20] sm:$0xff pattern:$0x73625140]
    %v127 = vld.sshfl [vmem:[#allocation1 + $0x28] sm:$0xff pattern:$0x73625140]
    %v128 = vld.sshfl [vmem:[#allocation1 + $0x30] sm:$0xff pattern:$0x73625140]
    %v129 = vld.sshfl [vmem:[#allocation1 + $0x38] sm:$0xff pattern:$0x73625140]
    %v146 = vpack.c.bf16 %v122, %v106
    %v147 = vpack.c.bf16 %v123, %v107
    %v148 = vpack.c.bf16 %v124, %v108
    %v149 = vpack.c.bf16 %v125, %v109
    %v150 = vpack.c.bf16 %v126, %v110
    %v151 = vpack.c.bf16 %v127, %v111
    %v152 = vpack.c.bf16 %v128, %v112
    %v153 = vpack.c.bf16 %v129, %v113
    %v154 = vld [vmem:[#allocation2] sm:$0xf]
    %v155 = vld [vmem:[#allocation2 + $0x4] sm:$0xf]
    %v156 = vld [vmem:[#allocation2 + $0x8] sm:$0xf]
    %v157 = vld [vmem:[#allocation2 + $0xc] sm:$0xf]
    %v158 = vld [vmem:[#allocation2 + $0x10] sm:$0xf]
    %v159 = vld [vmem:[#allocation2 + $0x14] sm:$0xf]
    %v160 = vld [vmem:[#allocation2 + $0x18] sm:$0xf]
    %v161 = vld [vmem:[#allocation2 + $0x1c] sm:$0xf]
    %v162 = vld [vmem:[#allocation2 + $0x20] sm:$0xf]
    %v163 = vld [vmem:[#allocation2 + $0x24] sm:$0xf]
    %v164 = vld [vmem:[#allocation2 + $0x28] sm:$0xf]
    %v165 = vld [vmem:[#allocation2 + $0x2c] sm:$0xf]
    %v166 = vld [vmem:[#allocation2 + $0x30] sm:$0xf]
    %v167 = vld [vmem:[#allocation2 + $0x34] sm:$0xf]
    %v168 = vld [vmem:[#allocation2 + $0x38] sm:$0xf]
    %v169 = vld [vmem:[#allocation2 + $0x3c] sm:$0xf]
    %v170 = vld [vmem:[#allocation2 + $0x40] sm:$0xf]
    %v171 = vld [vmem:[#allocation2 + $0x44] sm:$0xf]
    %v172 = vld [vmem:[#allocation2 + $0x48] sm:$0xf]
    %v173 = vld [vmem:[#allocation2 + $0x4c] sm:$0xf]
    %v174 = vld [vmem:[#allocation2 + $0x50] sm:$0xf]
    %v175 = vld [vmem:[#allocation2 + $0x54] sm:$0xf]
    %v176 = vld [vmem:[#allocation2 + $0x58] sm:$0xf]
    %v177 = vld [vmem:[#allocation2 + $0x5c] sm:$0xf]
    %v178 = vld [vmem:[#allocation2 + $0x60] sm:$0xf]
    %v179 = vld [vmem:[#allocation2 + $0x64] sm:$0xf]
    %v180 = vld [vmem:[#allocation2 + $0x68] sm:$0xf]
    %v181 = vld [vmem:[#allocation2 + $0x6c] sm:$0xf]
    %v182 = vld [vmem:[#allocation2 + $0x70] sm:$0xf]
    %v183 = vld [vmem:[#allocation2 + $0x74] sm:$0xf]
    %v184 = vld [vmem:[#allocation2 + $0x78] sm:$0xf]
    %v185 = vld [vmem:[#allocation2 + $0x7c] sm:$0xf]
    %v186 = vld [vmem:[#allocation2 + $0x80] sm:$0xf]
    %v187 = vld [vmem:[#allocation2 + $0x84] sm:$0xf]
    %v188 = vld [vmem:[#allocation2 + $0x88] sm:$0xf]
    %v189 = vld [vmem:[#allocation2 + $0x8c] sm:$0xf]
    %v190 = vld [vmem:[#allocation2 + $0x90] sm:$0xf]
    %v191 = vld [vmem:[#allocation2 + $0x94] sm:$0xf]
    %v192 = vld [vmem:[#allocation2 + $0x98] sm:$0xf]
    %v193 = vld [vmem:[#allocation2 + $0x9c] sm:$0xf]
    %v194 = vld [vmem:[#allocation2 + $0xa0] sm:$0xf]
    %v195 = vld [vmem:[#allocation2 + $0xa4] sm:$0xf]
    %v196 = vld [vmem:[#allocation2 + $0xa8] sm:$0xf]
    %v197 = vld [vmem:[#allocation2 + $0xac] sm:$0xf]
    %v198 = vld [vmem:[#allocation2 + $0xb0] sm:$0xf]
    %v199 = vld [vmem:[#allocation2 + $0xb4] sm:$0xf]
    %v200 = vld [vmem:[#allocation2 + $0xb8] sm:$0xf]
    %v201 = vld [vmem:[#allocation2 + $0xbc] sm:$0xf]
    %v202 = vld [vmem:[#allocation2 + $0xc0] sm:$0xf]
    %v203 = vld [vmem:[#allocation2 + $0xc4] sm:$0xf]
    %v204 = vld [vmem:[#allocation2 + $0xc8] sm:$0xf]
    %v205 = vld [vmem:[#allocation2 + $0xcc] sm:$0xf]
    %v206 = vld [vmem:[#allocation2 + $0xd0] sm:$0xf]
    %v207 = vld [vmem:[#allocation2 + $0xd4] sm:$0xf]
    %v208 = vld [vmem:[#allocation2 + $0xd8] sm:$0xf]
    %v209 = vld [vmem:[#allocation2 + $0xdc] sm:$0xf]
    %v210 = vld [vmem:[#allocation2 + $0xe0] sm:$0xf]
    %v211 = vld [vmem:[#allocation2 + $0xe4] sm:$0xf]
    %v212 = vld [vmem:[#allocation2 + $0xe8] sm:$0xf]
    %v213 = vld [vmem:[#allocation2 + $0xec] sm:$0xf]
    %v214 = vld [vmem:[#allocation2 + $0xf0] sm:$0xf]
    %v215 = vld [vmem:[#allocation2 + $0xf4] sm:$0xf]
    %v216 = vld [vmem:[#allocation2 + $0xf8] sm:$0xf]
    %v217 = vld [vmem:[#allocation2 + $0xfc] sm:$0xf]
    %v218 = vld [vmem:[#allocation2 + $0x100] sm:$0xf]
    %v219 = vld [vmem:[#allocation2 + $0x104] sm:$0xf]
    %v220 = vld [vmem:[#allocation2 + $0x108] sm:$0xf]
    %v221 = vld [vmem:[#allocation2 + $0x10c] sm:$0xf]
    %v222 = vld [vmem:[#allocation2 + $0x110] sm:$0xf]
    %v223 = vld [vmem:[#allocation2 + $0x114] sm:$0xf]
    %v224 = vld [vmem:[#allocation2 + $0x118] sm:$0xf]
    %v225 = vld [vmem:[#allocation2 + $0x11c] sm:$0xf]
    %v226 = vld [vmem:[#allocation2 + $0x120] sm:$0xf]
    %v227 = vld [vmem:[#allocation2 + $0x124] sm:$0xf]
    %v228 = vld [vmem:[#allocation2 + $0x128] sm:$0xf]
    %v229 = vld [vmem:[#allocation2 + $0x12c] sm:$0xf]
    %v230 = vld [vmem:[#allocation2 + $0x130] sm:$0xf]
    %v231 = vld [vmem:[#allocation2 + $0x134] sm:$0xf]
    %v232 = vld [vmem:[#allocation2 + $0x138] sm:$0xf]
    %v233 = vld [vmem:[#allocation2 + $0x13c] sm:$0xf]
    %v234 = vld [vmem:[#allocation2 + $0x140] sm:$0xf]
    %v235 = vld [vmem:[#allocation2 + $0x144] sm:$0xf]
    %v236 = vld [vmem:[#allocation2 + $0x148] sm:$0xf]
    %v237 = vld [vmem:[#allocation2 + $0x14c] sm:$0xf]
    %v238 = vld [vmem:[#allocation2 + $0x150] sm:$0xf]
    %v239 = vld [vmem:[#allocation2 + $0x154] sm:$0xf]
    %v240 = vld [vmem:[#allocation2 + $0x158] sm:$0xf]
    %v241 = vld [vmem:[#allocation2 + $0x15c] sm:$0xf]
    %v242 = vld [vmem:[#allocation2 + $0x160] sm:$0xf]
    %v243 = vld [vmem:[#allocation2 + $0x164] sm:$0xf]
    %v244 = vld [vmem:[#allocation2 + $0x168] sm:$0xf]
    %v245 = vld [vmem:[#allocation2 + $0x16c] sm:$0xf]
    %v246 = vld [vmem:[#allocation2 + $0x170] sm:$0xf]
    %v247 = vld [vmem:[#allocation2 + $0x174] sm:$0xf]
    %v248 = vld [vmem:[#allocation2 + $0x178] sm:$0xf]
    %v249 = vld [vmem:[#allocation2 + $0x17c] sm:$0xf]
    %v250 = vld [vmem:[#allocation2 + $0x180] sm:$0xf]
    %v251 = vld [vmem:[#allocation2 + $0x184] sm:$0xf]
    %v252 = vld [vmem:[#allocation2 + $0x188] sm:$0xf]
    %v253 = vld [vmem:[#allocation2 + $0x18c] sm:$0xf]
    %v254 = vld [vmem:[#allocation2 + $0x190] sm:$0xf]
    %v255 = vld [vmem:[#allocation2 + $0x194] sm:$0xf]
    %v256 = vld [vmem:[#allocation2 + $0x198] sm:$0xf]
    %v257 = vld [vmem:[#allocation2 + $0x19c] sm:$0xf]
    %v258 = vld [vmem:[#allocation2 + $0x1a0] sm:$0xf]
    %v259 = vld [vmem:[#allocation2 + $0x1a4] sm:$0xf]
    %v260 = vld [vmem:[#allocation2 + $0x1a8] sm:$0xf]
    %v261 = vld [vmem:[#allocation2 + $0x1ac] sm:$0xf]
    %v262 = vld [vmem:[#allocation2 + $0x1b0] sm:$0xf]
    %v263 = vld [vmem:[#allocation2 + $0x1b4] sm:$0xf]
    %v264 = vld [vmem:[#allocation2 + $0x1b8] sm:$0xf]
    %v265 = vld [vmem:[#allocation2 + $0x1bc] sm:$0xf]
    %v266 = vld [vmem:[#allocation2 + $0x1c0] sm:$0xf]
    %v267 = vld [vmem:[#allocation2 + $0x1c4] sm:$0xf]
    %v268 = vld [vmem:[#allocation2 + $0x1c8] sm:$0xf]
    %v269 = vld [vmem:[#allocation2 + $0x1cc] sm:$0xf]
    %v270 = vld [vmem:[#allocation2 + $0x1d0] sm:$0xf]
    %v271 = vld [vmem:[#allocation2 + $0x1d4] sm:$0xf]
    %v272 = vld [vmem:[#allocation2 + $0x1d8] sm:$0xf]
    %v273 = vld [vmem:[#allocation2 + $0x1dc] sm:$0xf]
    %v274 = vld [vmem:[#allocation2 + $0x1e0] sm:$0xf]
    %v275 = vld [vmem:[#allocation2 + $0x1e4] sm:$0xf]
    %v276 = vld [vmem:[#allocation2 + $0x1e8] sm:$0xf]
    %v277 = vld [vmem:[#allocation2 + $0x1ec] sm:$0xf]
    %v278 = vld [vmem:[#allocation2 + $0x1f0] sm:$0xf]
    %v279 = vld [vmem:[#allocation2 + $0x1f4] sm:$0xf]
    %v280 = vld [vmem:[#allocation2 + $0x1f8] sm:$0xf]
    %v281 = vld [vmem:[#allocation2 + $0x1fc] sm:$0xf]
    %v282 = vld [vmem:[%s2] sm:$0x1]
    %v284 = vperm.slane %v282, 0
    %v414 = vunpack.c.l.b16 %v154
    %v415 = vunpack.c.l.b16 %v155
    %v416 = vunpack.c.l.b16 %v156
    %v417 = vunpack.c.l.b16 %v157
    %v418 = vunpack.c.l.b16 %v158
    %v419 = vunpack.c.l.b16 %v159
    %v420 = vunpack.c.l.b16 %v160
    %v421 = vunpack.c.l.b16 %v161
    %v422 = vunpack.c.l.b16 %v162
    %v423 = vunpack.c.l.b16 %v163
    %v424 = vunpack.c.l.b16 %v164
    %v425 = vunpack.c.l.b16 %v165
    %v426 = vunpack.c.l.b16 %v166
    %v427 = vunpack.c.l.b16 %v167
    %v428 = vunpack.c.l.b16 %v168
    %v429 = vunpack.c.l.b16 %v169
    %v430 = vunpack.c.l.b16 %v170
    %v431 = vunpack.c.l.b16 %v171
    %v432 = vunpack.c.l.b16 %v172
    %v433 = vunpack.c.l.b16 %v173
    %v434 = vunpack.c.l.b16 %v174
    %v435 = vunpack.c.l.b16 %v175
    %v436 = vunpack.c.l.b16 %v176
    %v437 = vunpack.c.l.b16 %v177
    %v438 = vunpack.c.l.b16 %v178
    %v439 = vunpack.c.l.b16 %v179
    %v440 = vunpack.c.l.b16 %v180
    %v441 = vunpack.c.l.b16 %v181
    %v442 = vunpack.c.l.b16 %v182
    %v443 = vunpack.c.l.b16 %v183
    %v444 = vunpack.c.l.b16 %v184
    %v445 = vunpack.c.l.b16 %v185
    %v446 = vunpack.c.l.b16 %v186
    %v447 = vunpack.c.l.b16 %v187
    %v448 = vunpack.c.l.b16 %v188
    %v449 = vunpack.c.l.b16 %v189
    %v450 = vunpack.c.l.b16 %v190
    %v451 = vunpack.c.l.b16 %v191
    %v452 = vunpack.c.l.b16 %v192
    %v453 = vunpack.c.l.b16 %v193
    %v454 = vunpack.c.l.b16 %v194
    %v455 = vunpack.c.l.b16 %v195
    %v456 = vunpack.c.l.b16 %v196
    %v457 = vunpack.c.l.b16 %v197
    %v458 = vunpack.c.l.b16 %v198
    %v459 = vunpack.c.l.b16 %v199
    %v460 = vunpack.c.l.b16 %v200
    %v461 = vunpack.c.l.b16 %v201
    %v462 = vunpack.c.l.b16 %v202
    %v463 = vunpack.c.l.b16 %v203
    %v464 = vunpack.c.l.b16 %v204
    %v465 = vunpack.c.l.b16 %v205
    %v466 = vunpack.c.l.b16 %v206
    %v467 = vunpack.c.l.b16 %v207
    %v468 = vunpack.c.l.b16 %v208
    %v469 = vunpack.c.l.b16 %v209
    %v470 = vunpack.c.l.b16 %v210
    %v471 = vunpack.c.l.b16 %v211
    %v472 = vunpack.c.l.b16 %v212
    %v473 = vunpack.c.l.b16 %v213
    %v474 = vunpack.c.l.b16 %v214
    %v475 = vunpack.c.l.b16 %v215
    %v476 = vunpack.c.l.b16 %v216
    %v477 = vunpack.c.l.b16 %v217
    %v478 = vunpack.c.l.b16 %v218
    %v479 = vunpack.c.l.b16 %v219
    %v480 = vunpack.c.l.b16 %v220
    %v481 = vunpack.c.l.b16 %v221
    %v482 = vunpack.c.l.b16 %v222
    %v483 = vunpack.c.l.b16 %v223
    %v484 = vunpack.c.l.b16 %v224
    %v485 = vunpack.c.l.b16 %v225
    %v486 = vunpack.c.l.b16 %v226
    %v487 = vunpack.c.l.b16 %v227
    %v488 = vunpack.c.l.b16 %v228
    %v489 = vunpack.c.l.b16 %v229
    %v490 = vunpack.c.l.b16 %v230
    %v491 = vunpack.c.l.b16 %v231
    %v492 = vunpack.c.l.b16 %v232
    %v493 = vunpack.c.l.b16 %v233
    %v494 = vunpack.c.l.b16 %v234
    %v495 = vunpack.c.l.b16 %v235
    %v496 = vunpack.c.l.b16 %v236
    %v497 = vunpack.c.l.b16 %v237
    %v498 = vunpack.c.l.b16 %v238
    %v499 = vunpack.c.l.b16 %v239
    %v500 = vunpack.c.l.b16 %v240
    %v501 = vunpack.c.l.b16 %v241
    %v502 = vunpack.c.l.b16 %v242
    %v503 = vunpack.c.l.b16 %v243
    %v504 = vunpack.c.l.b16 %v244
    %v505 = vunpack.c.l.b16 %v245
    %v506 = vunpack.c.l.b16 %v246
    %v507 = vunpack.c.l.b16 %v247
    %v508 = vunpack.c.l.b16 %v248
    %v509 = vunpack.c.l.b16 %v249
    %v510 = vunpack.c.l.b16 %v250
    %v511 = vunpack.c.l.b16 %v251
    %v512 = vunpack.c.l.b16 %v252
    %v513 = vunpack.c.l.b16 %v253
    %v514 = vunpack.c.l.b16 %v254
    %v515 = vunpack.c.l.b16 %v255
    %v516 = vunpack.c.l.b16 %v256
    %v517 = vunpack.c.l.b16 %v257
    %v518 = vunpack.c.l.b16 %v258
    %v519 = vunpack.c.l.b16 %v259
    %v520 = vunpack.c.l.b16 %v260
    %v521 = vunpack.c.l.b16 %v261
    %v522 = vunpack.c.l.b16 %v262
    %v523 = vunpack.c.l.b16 %v263
    %v524 = vunpack.c.l.b16 %v264
    %v525 = vunpack.c.l.b16 %v265
    %v526 = vunpack.c.l.b16 %v266
    %v527 = vunpack.c.l.b16 %v267
    %v528 = vunpack.c.l.b16 %v268
    %v529 = vunpack.c.l.b16 %v269
    %v530 = vunpack.c.l.b16 %v270
    %v531 = vunpack.c.l.b16 %v271
    %v532 = vunpack.c.l.b16 %v272
    %v533 = vunpack.c.l.b16 %v273
    %v534 = vunpack.c.l.b16 %v274
    %v535 = vunpack.c.l.b16 %v275
    %v536 = vunpack.c.l.b16 %v276
    %v537 = vunpack.c.l.b16 %v277
    %v538 = vunpack.c.l.b16 %v278
    %v539 = vunpack.c.l.b16 %v279
    %v540 = vunpack.c.l.b16 %v280
    %v541 = vunpack.c.l.b16 %v281
    %v542 = vpack.c.b16 %v415, %v414
    %v543 = vpack.c.b16 %v417, %v416
    %v544 = vpack.c.b16 %v419, %v418
    %v545 = vpack.c.b16 %v421, %v420
    %v546 = vpack.c.b16 %v423, %v422
    %v547 = vpack.c.b16 %v425, %v424
    %v548 = vpack.c.b16 %v427, %v426
    %v549 = vpack.c.b16 %v429, %v428
    %v550 = vpack.c.b16 %v431, %v430
    %v551 = vpack.c.b16 %v433, %v432
    %v552 = vpack.c.b16 %v435, %v434
    %v553 = vpack.c.b16 %v437, %v436
    %v554 = vpack.c.b16 %v439, %v438
    %v555 = vpack.c.b16 %v441, %v440
    %v556 = vpack.c.b16 %v443, %v442
    %v557 = vpack.c.b16 %v445, %v444
    %v558 = vpack.c.b16 %v447, %v446
    %v559 = vpack.c.b16 %v449, %v448
    %v560 = vpack.c.b16 %v451, %v450
    %v561 = vpack.c.b16 %v453, %v452
    %v562 = vpack.c.b16 %v455, %v454
    %v563 = vpack.c.b16 %v457, %v456
    %v564 = vpack.c.b16 %v459, %v458
    %v565 = vpack.c.b16 %v461, %v460
    %v566 = vpack.c.b16 %v463, %v462
    %v567 = vpack.c.b16 %v465, %v464
    %v568 = vpack.c.b16 %v467, %v466
    %v569 = vpack.c.b16 %v469, %v468
    %v570 = vpack.c.b16 %v471, %v470
    %v571 = vpack.c.b16 %v473, %v472
    %v572 = vpack.c.b16 %v475, %v474
    %v573 = vpack.c.b16 %v477, %v476
    %v574 = vpack.c.b16 %v479, %v478
    %v575 = vpack.c.b16 %v481, %v480
    %v576 = vpack.c.b16 %v483, %v482
    %v577 = vpack.c.b16 %v485, %v484
    %v578 = vpack.c.b16 %v487, %v486
    %v579 = vpack.c.b16 %v489, %v488
    %v580 = vpack.c.b16 %v491, %v490
    %v581 = vpack.c.b16 %v493, %v492
    %v582 = vpack.c.b16 %v495, %v494
    %v583 = vpack.c.b16 %v497, %v496
    %v584 = vpack.c.b16 %v499, %v498
    %v585 = vpack.c.b16 %v501, %v500
    %v586 = vpack.c.b16 %v503, %v502
    %v587 = vpack.c.b16 %v505, %v504
    %v588 = vpack.c.b16 %v507, %v506
    %v589 = vpack.c.b16 %v509, %v508
    %v590 = vpack.c.b16 %v511, %v510
    %v591 = vpack.c.b16 %v513, %v512
    %v592 = vpack.c.b16 %v515, %v514
    %v593 = vpack.c.b16 %v517, %v516
    %v594 = vpack.c.b16 %v519, %v518
    %v595 = vpack.c.b16 %v521, %v520
    %v596 = vpack.c.b16 %v523, %v522
    %v597 = vpack.c.b16 %v525, %v524
    %v598 = vpack.c.b16 %v527, %v526
    %v599 = vpack.c.b16 %v529, %v528
    %v600 = vpack.c.b16 %v531, %v530
    %v601 = vpack.c.b16 %v533, %v532
    %v602 = vpack.c.b16 %v535, %v534
    %v603 = vpack.c.b16 %v537, %v536
    %v604 = vpack.c.b16 %v539, %v538
    %v605 = vpack.c.b16 %v541, %v540
    %670 = vmatpush.bf16.msra.mxu0 %v549
    %671 = vmatpush.bf16.msra.mxu0 %v548
    %672 = vmatpush.bf16.msra.mxu0 %v547
    %673 = vmatpush.bf16.msra.mxu0 %v546
    %674 = vmatpush.bf16.msra.mxu0 %v545
    %675 = vmatpush.bf16.msra.mxu0 %v544
    %676 = vmatpush.bf16.msra.mxu0 %v543
    %677 = vmatpush.bf16.msra.mxu0 %v542
    %678 = vmatmul.bf16.gmra.mxu0 %v146
    %v679 = vpop.f32.mrf.mxu0
    %v680 = vadd.f32 %v284, %v679
    %v681 = vpop.f32.mrf.mxu0
    %v682 = vadd.f32 %v284, %v681
    %683 = vdwg.mxu0
    %684 = vmatpush.bf16.msra.mxu0 %v557
    %685 = vmatpush.bf16.msra.mxu0 %v556
    %686 = vmatpush.bf16.msra.mxu0 %v555
    %687 = vmatpush.bf16.msra.mxu0 %v554
    %688 = vmatpush.bf16.msra.mxu0 %v553
    %689 = vmatpush.bf16.msra.mxu0 %v552
    %690 = vmatpush.bf16.msra.mxu0 %v551
    %691 = vmatpush.bf16.msra.mxu0 %v550
    %692 = vmatmul.bf16.gmra.mxu0 %v147
    %v693 = vpop.f32.mrf.mxu0
    %v694 = vadd.f32 %v680, %v693
    %v695 = vpop.f32.mrf.mxu0
    %v696 = vadd.f32 %v682, %v695
    %697 = vdwg.mxu0
    %698 = vmatpush.bf16.msra.mxu0 %v565
    %699 = vmatpush.bf16.msra.mxu0 %v564
    %700 = vmatpush.bf16.msra.mxu0 %v563
    %701 = vmatpush.bf16.msra.mxu0 %v562
    %702 = vmatpush.bf16.msra.mxu0 %v561
    %703 = vmatpush.bf16.msra.mxu0 %v560
    %704 = vmatpush.bf16.msra.mxu0 %v559
    %705 = vmatpush.bf16.msra.mxu0 %v558
    %706 = vmatmul.bf16.gmra.mxu0 %v148
    %v707 = vpop.f32.mrf.mxu0
    %v708 = vadd.f32 %v694, %v707
    %v709 = vpop.f32.mrf.mxu0
    %v710 = vadd.f32 %v696, %v709
    %711 = vdwg.mxu0
    %712 = vmatpush.bf16.msra.mxu0 %v573
    %713 = vmatpush.bf16.msra.mxu0 %v572
    %714 = vmatpush.bf16.msra.mxu0 %v571
    %715 = vmatpush.bf16.msra.mxu0 %v570
    %716 = vmatpush.bf16.msra.mxu0 %v569
    %717 = vmatpush.bf16.msra.mxu0 %v568
    %718 = vmatpush.bf16.msra.mxu0 %v567
    %719 = vmatpush.bf16.msra.mxu0 %v566
    %720 = vmatmul.bf16.gmra.mxu0 %v149
    %v721 = vpop.f32.mrf.mxu0
    %v722 = vadd.f32 %v708, %v721
    %v723 = vpop.f32.mrf.mxu0
    %v724 = vadd.f32 %v710, %v723
    %725 = vdwg.mxu0
    %726 = vmatpush.bf16.msra.mxu0 %v581
    %727 = vmatpush.bf16.msra.mxu0 %v580
    %728 = vmatpush.bf16.msra.mxu0 %v579
    %729 = vmatpush.bf16.msra.mxu0 %v578
    %730 = vmatpush.bf16.msra.mxu0 %v577
    %731 = vmatpush.bf16.msra.mxu0 %v576
    %732 = vmatpush.bf16.msra.mxu0 %v575
    %733 = vmatpush.bf16.msra.mxu0 %v574
    %734 = vmatmul.bf16.gmra.mxu0 %v150
    %v735 = vpop.f32.mrf.mxu0
    %v736 = vadd.f32 %v722, %v735
    %v737 = vpop.f32.mrf.mxu0
    %v738 = vadd.f32 %v724, %v737
    %739 = vdwg.mxu0
    %740 = vmatpush.bf16.msra.mxu0 %v589
    %741 = vmatpush.bf16.msra.mxu0 %v588
    %742 = vmatpush.bf16.msra.mxu0 %v587
    %743 = vmatpush.bf16.msra.mxu0 %v586
    %744 = vmatpush.bf16.msra.mxu0 %v585
    %745 = vmatpush.bf16.msra.mxu0 %v584
    %746 = vmatpush.bf16.msra.mxu0 %v583
    %747 = vmatpush.bf16.msra.mxu0 %v582
    %748 = vmatmul.bf16.gmra.mxu0 %v151
    %v749 = vpop.f32.mrf.mxu0
    %v750 = vadd.f32 %v736, %v749
    %v751 = vpop.f32.mrf.mxu0
    %v752 = vadd.f32 %v738, %v751
    %753 = vdwg.mxu0
    %754 = vmatpush.bf16.msra.mxu0 %v597
    %755 = vmatpush.bf16.msra.mxu0 %v596
    %756 = vmatpush.bf16.msra.mxu0 %v595
    %757 = vmatpush.bf16.msra.mxu0 %v594
    %758 = vmatpush.bf16.msra.mxu0 %v593
    %759 = vmatpush.bf16.msra.mxu0 %v592
    %760 = vmatpush.bf16.msra.mxu0 %v591
    %761 = vmatpush.bf16.msra.mxu0 %v590
    %762 = vmatmul.bf16.gmra.mxu0 %v152
    %v763 = vpop.f32.mrf.mxu0
    %v764 = vadd.f32 %v750, %v763
    %v765 = vpop.f32.mrf.mxu0
    %v766 = vadd.f32 %v752, %v765
    %767 = vdwg.mxu0
    %768 = vmatpush.bf16.msra.mxu0 %v605
    %769 = vmatpush.bf16.msra.mxu0 %v604
    %770 = vmatpush.bf16.msra.mxu0 %v603
    %771 = vmatpush.bf16.msra.mxu0 %v602
    %772 = vmatpush.bf16.msra.mxu0 %v601
    %773 = vmatpush.bf16.msra.mxu0 %v600
    %774 = vmatpush.bf16.msra.mxu0 %v599
    %775 = vmatpush.bf16.msra.mxu0 %v598
    %776 = vmatmul.bf16.gmra.mxu0 %v153
    %v777 = vpop.f32.mrf.mxu0
    %v778 = vadd.f32 %v764, %v777
    %v779 = vpop.f32.mrf.mxu0
    %v780 = vadd.f32 %v766, %v779
    %781 = vdwg.mxu0
    %v782 = vmax.f32 %v778, 0.0
    %v783 = vmax.f32 %v780, 0.0
    %v784 = vpack.c.bf16 %v783, %v782
    %v785 = vld [vmem:[#allocation5] sm:$0xf]
    %v786 = vld [vmem:[#allocation5 + $0x4] sm:$0xf]
    %v787 = vld [vmem:[#allocation5 + $0x8] sm:$0xf]
    %v788 = vld [vmem:[#allocation5 + $0xc] sm:$0xf]
    %v789 = vld [vmem:[#allocation5 + $0x10] sm:$0xf]
    %v790 = vld [vmem:[#allocation5 + $0x14] sm:$0xf]
    %v791 = vld [vmem:[#allocation5 + $0x18] sm:$0xf]
    %v792 = vld [vmem:[#allocation5 + $0x1c] sm:$0xf]
    %v793 = vld [vmem:[#allocation5 + $0x20] sm:$0xf]
    %v794 = vld [vmem:[#allocation5 + $0x24] sm:$0xf]
    %v795 = vld [vmem:[#allocation5 + $0x28] sm:$0xf]
    %v796 = vld [vmem:[#allocation5 + $0x2c] sm:$0xf]
    %v797 = vld [vmem:[#allocation5 + $0x30] sm:$0xf]
    %v798 = vld [vmem:[#allocation5 + $0x34] sm:$0xf]
    %v799 = vld [vmem:[#allocation5 + $0x38] sm:$0xf]
    %v800 = vld [vmem:[#allocation5 + $0x3c] sm:$0xf]
    %v801 = vld [vmem:[%s4] sm:$0x1]
    %v803 = vperm.slane %v801, 0
    %v821 = vunpack.c.l.b16 %v785
    %v822 = vunpack.c.l.b16 %v786
    %v823 = vunpack.c.l.b16 %v787
    %v824 = vunpack.c.l.b16 %v788
    %v825 = vunpack.c.l.b16 %v789
    %v826 = vunpack.c.l.b16 %v790
    %v827 = vunpack.c.l.b16 %v791
    %v828 = vunpack.c.l.b16 %v792
    %v829 = vunpack.c.l.b16 %v793
    %v830 = vunpack.c.l.b16 %v794
    %v831 = vunpack.c.l.b16 %v795
    %v832 = vunpack.c.l.b16 %v796
    %v833 = vunpack.c.l.b16 %v797
    %v834 = vunpack.c.l.b16 %v798
    %v835 = vunpack.c.l.b16 %v799
    %v836 = vunpack.c.l.b16 %v800
    %v837 = vpack.c.b16 %v822, %v821
    %v838 = vpack.c.b16 %v824, %v823
    %v839 = vpack.c.b16 %v826, %v825
    %v840 = vpack.c.b16 %v828, %v827
    %v841 = vpack.c.b16 %v830, %v829
    %v842 = vpack.c.b16 %v832, %v831
    %v843 = vpack.c.b16 %v834, %v833
    %v844 = vpack.c.b16 %v836, %v835
    %853 = vmatpush.bf16.msra.mxu0 %v844
    %854 = vmatpush.bf16.msra.mxu0 %v843
    %855 = vmatpush.bf16.msra.mxu0 %v842
    %856 = vmatpush.bf16.msra.mxu0 %v841
    %857 = vmatpush.bf16.msra.mxu0 %v840
    %858 = vmatpush.bf16.msra.mxu0 %v839
    %859 = vmatpush.bf16.msra.mxu0 %v838
    %860 = vmatpush.bf16.msra.mxu0 %v837
    %861 = vmatmul.bf16.gmra.mxu0 %v784
    %v862 = vpop.f32.mrf.mxu0
    %v863 = vadd.f32 %v803, %v862
    %v864 = vpop.f32.mrf.mxu0
    %v865 = vadd.f32 %v803, %v864
    %866 = vdwg.mxu0
    %v867 = vmax.f32 %v863, 0.0
    %v868 = vmax.f32 %v865, 0.0
    %v869 = vpack.c.bf16 %v868, %v867
    %v870 = vld [vmem:[%s5] sm:$0xff]
    %v871 = vld [vmem:[%s5 + $0x8] sm:$0xff]
    %v872 = vld [vmem:[%s5 + $0x10] sm:$0xff]
    %v873 = vld [vmem:[%s5 + $0x18] sm:$0xff]
    %v874 = vld [vmem:[%s5 + $0x20] sm:$0xff]
    %v875 = vld [vmem:[%s5 + $0x28] sm:$0xff]
    %v876 = vld [vmem:[%s5 + $0x30] sm:$0xff]
    %v877 = vld [vmem:[%s5 + $0x38] sm:$0xff]
    %v878 = vld [vmem:[%s5 + $0x40] sm:$0xff]
    %v879 = vld [vmem:[%s5 + $0x48] sm:$0xff]
    %v880 = vld [vmem:[%s5 + $0x50] sm:$0xff]
    %v881 = vld [vmem:[%s5 + $0x58] sm:$0xff]
    %v882 = vld [vmem:[%s5 + $0x60] sm:$0xff]
    %v883 = vld [vmem:[%s5 + $0x68] sm:$0xff]
    %v884 = vld [vmem:[%s5 + $0x70] sm:$0xff]
    %v885 = vld [vmem:[%s5 + $0x78] sm:$0xff]
    %v886 = vld [vmem:[%s6] sm:$0x3]
    %v888 = vperm.slane %v886, 0
    %v889 = vperm.slane %v886, 1
    %v908 = vunpack.c.l.b16 %v870
    %v909 = vunpack.c.h.b16 %v870
    %v910 = vunpack.c.l.b16 %v871
    %v911 = vunpack.c.h.b16 %v871
    %v912 = vunpack.c.l.b16 %v872
    %v913 = vunpack.c.h.b16 %v872
    %v914 = vunpack.c.l.b16 %v873
    %v915 = vunpack.c.h.b16 %v873
    %v916 = vunpack.c.l.b16 %v874
    %v917 = vunpack.c.h.b16 %v874
    %v918 = vunpack.c.l.b16 %v875
    %v919 = vunpack.c.h.b16 %v875
    %v920 = vunpack.c.l.b16 %v876
    %v921 = vunpack.c.h.b16 %v876
    %v922 = vunpack.c.l.b16 %v877
    %v923 = vunpack.c.h.b16 %v877
    %v924 = vunpack.c.l.b16 %v878
    %v925 = vunpack.c.h.b16 %v878
    %v926 = vunpack.c.l.b16 %v879
    %v927 = vunpack.c.h.b16 %v879
    %v928 = vunpack.c.l.b16 %v880
    %v929 = vunpack.c.h.b16 %v880
    %v930 = vunpack.c.l.b16 %v881
    %v931 = vunpack.c.h.b16 %v881
    %v932 = vunpack.c.l.b16 %v882
    %v933 = vunpack.c.h.b16 %v882
    %v934 = vunpack.c.l.b16 %v883
    %v935 = vunpack.c.h.b16 %v883
    %v936 = vunpack.c.l.b16 %v884
    %v937 = vunpack.c.h.b16 %v884
    %v938 = vunpack.c.l.b16 %v885
    %v939 = vunpack.c.h.b16 %v885
    %v940 = vpack.c.b16 %v910, %v908
    %v941 = vpack.c.b16 %v911, %v909
    %v942 = vpack.c.b16 %v914, %v912
    %v943 = vpack.c.b16 %v915, %v913
    %v944 = vpack.c.b16 %v918, %v916
    %v945 = vpack.c.b16 %v919, %v917
    %v946 = vpack.c.b16 %v922, %v920
    %v947 = vpack.c.b16 %v923, %v921
    %v948 = vpack.c.b16 %v926, %v924
    %v949 = vpack.c.b16 %v927, %v925
    %v950 = vpack.c.b16 %v930, %v928
    %v951 = vpack.c.b16 %v931, %v929
    %v952 = vpack.c.b16 %v934, %v932
    %v953 = vpack.c.b16 %v935, %v933
    %v954 = vpack.c.b16 %v938, %v936
    %v955 = vpack.c.b16 %v939, %v937
    %972 = vmatpush.bf16.msra.mxu0 %v954
    %973 = vmatpush.bf16.msra.mxu0 %v952
    %974 = vmatpush.bf16.msra.mxu0 %v950
    %975 = vmatpush.bf16.msra.mxu0 %v948
    %976 = vmatpush.bf16.msra.mxu0 %v946
    %977 = vmatpush.bf16.msra.mxu0 %v944
    %978 = vmatpush.bf16.msra.mxu0 %v942
    %979 = vmatpush.bf16.msra.mxu0 %v940
    %980 = vmatmul.bf16.gmra.mxu0 %v869
    %v981 = vpop.f32.mrf.mxu0
    %v982 = vadd.f32 %v888, %v981
    %v983 = vpop.f32.mrf.mxu0
    %v984 = vadd.f32 %v888, %v983
    %985 = vdwg.mxu0
    %986 = vmatpush.bf16.msra.mxu0 %v955
    %987 = vmatpush.bf16.msra.mxu0 %v953
    %988 = vmatpush.bf16.msra.mxu0 %v951
    %989 = vmatpush.bf16.msra.mxu0 %v949
    %990 = vmatpush.bf16.msra.mxu0 %v947
    %991 = vmatpush.bf16.msra.mxu0 %v945
    %992 = vmatpush.bf16.msra.mxu0 %v943
    %993 = vmatpush.bf16.msra.mxu0 %v941
    %994 = vmatmul.bf16.gmra.mxu0 %v869
    %v995 = vpop.f32.mrf.mxu0
    %v996 = vadd.f32 %v889, %v995
    %v997 = vpop.f32.mrf.mxu0
    %v998 = vadd.f32 %v889, %v997
    %999 = vdwg.mxu0
    %v1004 = vrot.slane %v996, 6
    %v1005 = vrot.slane %v998, 6
    %vm1006 = vcmask 1041408
    %v1007 = vsel %vm1006, %v982, %v1004
    %vm1008 = vcmask 1043458
    %v1009 = vsel %vm1008, %v982, %v1004
    %v1010 = vrot.slane %v1009, 2
    %vm1011 = vcmask 1045508
    %v1012 = vsel %vm1011, %v982, %v1004
    %v1013 = vrot.slane %v1012, 4
    %vm1014 = vcmask 1045504
    %v1015 = vsel %vm1014, %v1004, %v982
    %v1016 = vrot.slane %v1015, 6
    %v1017 = vsel %vm1006, %v984, %v1005
    %v1018 = vsel %vm1008, %v984, %v1005
    %v1019 = vrot.slane %v1018, 2
    %v1020 = vsel %vm1011, %v984, %v1005
    %v1021 = vrot.slane %v1020, 4
    %v1022 = vsel %vm1014, %v1005, %v984
    %v1023 = vrot.slane %v1022, 6
    %1032 = vst [vmem:[#allocation7] sm:$0xf] %v1007
    %1033 = vst [vmem:[#allocation7 + $0x4] sm:$0xf] %v1010
    %1034 = vst [vmem:[#allocation7 + $0x8] sm:$0xf] %v1013
    %1035 = vst [vmem:[#allocation7 + $0xc] sm:$0xf] %v1016
    %1036 = vst [vmem:[#allocation7 + $0x10] sm:$0xf] %v1017
    %1037 = vst [vmem:[#allocation7 + $0x14] sm:$0xf] %v1019
    %1038 = vst [vmem:[#allocation7 + $0x18] sm:$0xf] %v1021
    %1039 = vst [vmem:[#allocation7 + $0x1c] sm:$0xf] %v1023
    // Predicated region
    $region38: #{forward.1} parent=1 // pred_check
      _
    $region39: #{forward.1} parent=1 // pred_check_branch
      %1041 = sbr.rel (0) target = $region41
    $region40: #{forward.1} parent=1 // pred_region
      %1043 = vsyncadd [#allocation4], 448
      %s1044 = sshll.u32 [#allocation7], 4
      %s1045 = int_to_ptr.vmem [resolvable:$true] %s1044
      %s1046 = sshll.u32 %s7, 4
      %s1047 = int_to_ptr.hbm [resolvable:$true] %s1046
      %1052 = dma.vmem_to_hbm [thread:$0]  %s1045, 64, %s1047, [#allocation4], 64, 64, 4
    $region41: #{forward.1} parent=1 // pred_fallthru
      _
    // Predicated region
    $region42: #{forward.1} parent=1 // pred_check
      _
    $region43: #{forward.1} parent=1 // pred_check_branch
      %1054 = sbr.rel (0) target = $region45
    $region44: #{forward.1} parent=1 // pred_region
      %1056 = dma.done [#allocation4], 512
    $region45: #{forward.1} parent=1 // pred_fallthru
      _
    %1057 = vsyncpa [#allocation3], 1
    %1058 = vsyncpa [#allocation6], 1
    %1059 = vsyncpa [#allocation4], 1

</llo_original>
